<compile_context>
chip_gen: v5e
topology: v5e:2x2
jax: 0.10.0
libtpu: 0.0.40
codegen_flags: <defaults>
</compile_context>

<pallas_src>
import jax
import jax.numpy as jnp
from jax.experimental import pallas as pl
from jax.experimental.pallas import tpu as pltpu

HIDDEN_SIZE = 128
VOCAB_SIZE = 15          # logits dim; embedding table has VOCAB_SIZE + 1 rows
V_PAD = 128              # lane-dense logits width
TILE_N_MAX = 2048        # max rows per grid step; only needs to be a multiple
                         # of 8 (sublane) -- sized for step-overhead/VMEM.
NEG_BIG = -1e30          # padded-logit bias so softmax ignores padded columns


def policy_kernel(ids_ref, emb1_ref, w2_ref, b2_ref, w3_ref, b3_ref, out_ref):
    n_tok = ids_ref.shape[0]
    n_emb = emb1_ref.shape[0]                      # vocab_size + 1 (= 16)

    # --- one-hot over the (tiny) vocab; out-of-range ids give an all-zero row
    ids = ids_ref[...]                             # (tile_n, 1) int32
    col = jax.lax.broadcasted_iota(jnp.int32, (n_tok, n_emb), 1)
    onehot = (col == ids).astype(jnp.float32)      # (tile_n, 16)

    # --- embedding + fc1 + b1 folded:  onehot @ (emb @ w1 + b1), then relu ---
    h = jnp.dot(onehot, emb1_ref[...], preferred_element_type=jnp.float32)
    h = jnp.maximum(h, 0.0)

    # --- fc2 + relu (operands optionally bf16; accumulate in f32) ---
    h = jnp.dot(h.astype(w2_ref.dtype), w2_ref[...],
                preferred_element_type=jnp.float32) + b2_ref[...]
    h = jnp.maximum(h, 0.0)

    # --- fc3 (padded to 128 lanes; padded bias columns carry NEG_BIG) ---
    logits = jnp.dot(h.astype(w3_ref.dtype), w3_ref[...],
                     preferred_element_type=jnp.float32) + b3_ref[...]

    # --- stable log_softmax over last dim (padded columns contribute 0) ---
    m = jnp.max(logits, axis=-1, keepdims=True)
    shifted = logits - m
    lse = jnp.log(jnp.sum(jnp.exp(shifted), axis=-1, keepdims=True))
    out_ref[...] = shifted - lse


def _round_up(x, m):
    return ((x + m - 1) // m) * m


def policy_network_forward(tokens, params, *, matmul_dtype=jnp.float32,
                           tile_n_max=TILE_N_MAX, return_padded=False):
    """tokens: (B, S) int ids in [0, VOCAB_SIZE].

    Returns (B, S, VOCAB_SIZE) float32 log-probabilities, or -- with
    return_padded=True -- the raw (n_pad, 128) kernel output (rows >= B*S and
    columns >= VOCAB_SIZE are padding and must be ignored by the consumer).
    """
    B, S = tokens.shape
    N = B * S

    emb, w1, b1, w2, b2, w3, b3 = params
    H = emb.shape[1]
    V = w3.shape[1]

    # Fold embedding lookup, fc1 and its bias:
    #   relu(onehot @ emb @ w1 + b1) == relu(onehot @ (emb @ w1 + b1))
    # because each one-hot row selects exactly one table row.
    emb1 = jnp.dot(emb, w1) + b1                   # (vocab+1, H) float32

    # Lane-dense fc3: pad to 128 output columns; padded bias = NEG_BIG so the
    # row max / logsumexp are unchanged by padding.
    w3p = jnp.zeros((H, V_PAD), jnp.float32).at[:, :V].set(w3)
    b3p = jnp.full((1, V_PAD), NEG_BIG, jnp.float32).at[:, :V].set(b3)

    # Optional bf16 operands for the two 128x128 matmuls (f32 accumulate).
    w2c = w2.astype(matmul_dtype)
    w3c = w3p.astype(matmul_dtype)

    # Row tile: as large as TILE_N_MAX, but always >= 2 grid steps so the
    # "parallel" row axis can shard across both TensorCores on v7x.
    tile_n = min(tile_n_max, max(8, _round_up(pl.cdiv(N, 2), 8)))
    n_tiles = pl.cdiv(N, tile_n)
    n_pad = n_tiles * tile_n

    # Pad the token axis (padded rows use id 0; sliced off / ignored later).
    ids = jnp.zeros((n_pad, 1), jnp.int32).at[:N, 0].set(
        tokens.reshape(N).astype(jnp.int32))

    row_spec = pl.BlockSpec((tile_n, 1), lambda i: (i, 0))
    out_spec = pl.BlockSpec((tile_n, V_PAD), lambda i: (i, 0))

    def resident(shape):
        # Whole-array block, constant index_map -> stays in VMEM across tiles.
        return pl.BlockSpec(shape, lambda i: (0, 0))

    out = pl.pallas_call(
        policy_kernel,
        out_shape=jax.ShapeDtypeStruct((n_pad, V_PAD), jnp.float32),
        grid=(n_tiles,),
        in_specs=[
            row_spec,
            resident(emb1.shape),
            resident(w2c.shape), resident(b2.shape),
            resident(w3c.shape), resident(b3p.shape),
        ],
        out_specs=out_spec,
        compiler_params=pltpu.CompilerParams(
            dimension_semantics=("parallel",),
            vmem_limit_bytes=32 * 1024 * 1024),
    )(ids, emb1, w2c, b2, w3c, b3p)

    if return_padded:
        return out                                  # (n_pad, V_PAD)
    return out[:N, :V].reshape(B, S, V)


def init_params(key, vocab_size=VOCAB_SIZE, hidden_size=HIDDEN_SIZE):
    ks = jax.random.split(key, 7)
    emb = jax.random.normal(ks[0], (vocab_size + 1, hidden_size), jnp.float32)

    def linear(kw, kb, fan_in, fan_out):
        bound = 1.0 / jnp.sqrt(fan_in)
        # stored as (in, out) == PyTorch weight.T
        w = jax.random.uniform(kw, (fan_in, fan_out), jnp.float32, -bound, bound)
        b = jax.random.uniform(kb, (1, fan_out), jnp.float32, -bound, bound)
        return w, b

    w1, b1 = linear(ks[1], ks[2], hidden_size, hidden_size)
    w2, b2 = linear(ks[3], ks[4], hidden_size, hidden_size)
    w3, b3 = linear(ks[5], ks[6], hidden_size, vocab_size)
    return emb, w1, b1, w2, b2, w3, b3


def reference_forward(tokens, params):
    emb, w1, b1, w2, b2, w3, b3 = params
    x = emb[tokens]                               # (B, S, H)
    x = jax.nn.relu(x @ w1 + b1[0])
    x = jax.nn.relu(x @ w2 + b2[0])
    x = x @ w3 + b3[0]
    return jax.nn.log_softmax(x, axis=-1)


if __name__ == "__main__":
    key = jax.random.PRNGKey(0)
    pkey, tkey = jax.random.split(key)

    params = init_params(pkey)

    # Small deterministic example (matches the module's intended usage).
    B, S = 2, 8
    tokens = jax.random.randint(tkey, (B, S), 0, VOCAB_SIZE + 1, dtype=jnp.int32)

    out = policy_network_forward(tokens, params)
    out = jax.block_until_ready(out)
    ref = reference_forward(tokens, params)

    assert out.shape == (B, S, VOCAB_SIZE)
    assert bool(jnp.all(jnp.isfinite(out))), "non-finite log-probs"
    assert jnp.allclose(out, ref, atol=1e-4, rtol=1e-4), "mismatch vs JAX reference"

    # bf16-operand matmul path (native-rate MXU on v6e/v7x); looser tolerance.
    out_bf16 = policy_network_forward(tokens, params, matmul_dtype=jnp.bfloat16)
    out_bf16 = jax.block_until_ready(out_bf16)
    assert bool(jnp.all(jnp.isfinite(out_bf16))), "non-finite bf16-path log-probs"
    assert jnp.allclose(out_bf16, ref, atol=5e-2, rtol=5e-2), "bf16 path mismatch"

    # Larger batch exercises the big-tile (TILE_N up to 2048), multi-step grid.
    B2, S2 = 32, 256
    tokens2 = jax.random.randint(jax.random.PRNGKey(1), (B2, S2), 0,
                                 VOCAB_SIZE + 1, dtype=jnp.int32)
    out2 = jax.block_until_ready(policy_network_forward(tokens2, params))
    ref2 = reference_forward(tokens2, params)
    assert jnp.allclose(out2, ref2, atol=1e-4, rtol=1e-4), "large-N mismatch"

    print("KERNEL_OK")
</pallas_src>

<mosaic_0001>
module attributes {stable_mosaic.version = 11 : i64} {
  func.func @policy_kernel(%arg0: i32, %arg1: memref<8x1xi32, #tpu.memory_space<vmem>>, %arg2: memref<16x128xf32, #tpu.memory_space<vmem>>, %arg3: memref<128x128xf32, #tpu.memory_space<vmem>>, %arg4: memref<1x128xf32, #tpu.memory_space<vmem>>, %arg5: memref<128x128xf32, #tpu.memory_space<vmem>>, %arg6: memref<1x128xf32, #tpu.memory_space<vmem>>, %arg7: memref<8x128xf32, #tpu.memory_space<vmem>>) attributes {dimension_semantics = [#tpu.dimension_semantics<parallel>], iteration_bounds = array<i64: 2>, scalar_prefetch = 0 : i64, scratch_operands = 0 : i64, tpu.core_type = #tpu.core_type<tc>, window_params = [{transform_indices = @transform_0, window_bounds = array<i64: 8, 1>}, {pipeline_mode = #tpu.pipeline_mode<synchronous>, transform_indices = @transform_1, window_bounds = array<i64: 16, 128>}, {pipeline_mode = #tpu.pipeline_mode<synchronous>, transform_indices = @transform_2, window_bounds = array<i64: 128, 128>}, {pipeline_mode = #tpu.pipeline_mode<synchronous>, transform_indices = @transform_3, window_bounds = array<i64: 1, 128>}, {pipeline_mode = #tpu.pipeline_mode<synchronous>, transform_indices = @transform_4, window_bounds = array<i64: 128, 128>}, {pipeline_mode = #tpu.pipeline_mode<synchronous>, transform_indices = @transform_5, window_bounds = array<i64: 1, 128>}, {transform_indices = @transform_6, window_bounds = array<i64: 8, 128>}]} {
    %c0 = arith.constant 0 : index
    %c0_0 = arith.constant 0 : index
    %0 = vector.load %arg1[%c0, %c0_0] : memref<8x1xi32, #tpu.memory_space<vmem>>, vector<8x1xi32>
    %1 = tpu.iota {dimensions = array<i32: 1>} : vector<8x16xi32>
    %2 = vector.broadcast %0 : vector<8x1xi32> to vector<8x16xi32>
    %3 = arith.cmpi eq, %1, %2 : vector<8x16xi32>
    %4 = arith.extui %3 : vector<8x16xi1> to vector<8x16xi32>
    %5 = arith.sitofp %4 : vector<8x16xi32> to vector<8x16xf32>
    %c0_1 = arith.constant 0 : index
    %c0_2 = arith.constant 0 : index
    %6 = vector.load %arg2[%c0_1, %c0_2] : memref<16x128xf32, #tpu.memory_space<vmem>>, vector<16x128xf32>
    %cst = arith.constant dense<0.000000e+00> : vector<8x128xf32>
    %7 = tpu.matmul %5, %6, %cst {dimension_numbers = #tpu.dot_dimension_numbers<[1], [0], [0], [1], [0, 0, 1, 1], [], []>} : vector<8x16xf32>, vector<16x128xf32>, vector<8x128xf32> -> vector<8x128xf32>
    %cst_3 = arith.constant 0.000000e+00 : f32
    %8 = vector.broadcast %cst_3 : f32 to vector<8x128xf32>
    %9 = arith.maximumf %7, %8 : vector<8x128xf32>
    %c0_4 = arith.constant 0 : index
    %c0_5 = arith.constant 0 : index
    %10 = vector.load %arg3[%c0_4, %c0_5] : memref<128x128xf32, #tpu.memory_space<vmem>>, vector<128x128xf32>
    %cst_6 = arith.constant dense<0.000000e+00> : vector<8x128xf32>
    %11 = tpu.matmul %9, %10, %cst_6 {dimension_numbers = #tpu.dot_dimension_numbers<[1], [0], [0], [1], [0, 0, 1, 1], [], []>} : vector<8x128xf32>, vector<128x128xf32>, vector<8x128xf32> -> vector<8x128xf32>
    %c0_7 = arith.constant 0 : index
    %c0_8 = arith.constant 0 : index
    %12 = vector.load %arg4[%c0_7, %c0_8] : memref<1x128xf32, #tpu.memory_space<vmem>>, vector<1x128xf32>
    %13 = vector.broadcast %12 : vector<1x128xf32> to vector<8x128xf32>
    %14 = arith.addf %11, %13 : vector<8x128xf32>
    %cst_9 = arith.constant 0.000000e+00 : f32
    %15 = vector.broadcast %cst_9 : f32 to vector<8x128xf32>
    %16 = arith.maximumf %14, %15 : vector<8x128xf32>
    %c0_10 = arith.constant 0 : index
    %c0_11 = arith.constant 0 : index
    %17 = vector.load %arg5[%c0_10, %c0_11] : memref<128x128xf32, #tpu.memory_space<vmem>>, vector<128x128xf32>
    %cst_12 = arith.constant dense<0.000000e+00> : vector<8x128xf32>
    %18 = tpu.matmul %16, %17, %cst_12 {dimension_numbers = #tpu.dot_dimension_numbers<[1], [0], [0], [1], [0, 0, 1, 1], [], []>} : vector<8x128xf32>, vector<128x128xf32>, vector<8x128xf32> -> vector<8x128xf32>
    %c0_13 = arith.constant 0 : index
    %c0_14 = arith.constant 0 : index
    %19 = vector.load %arg6[%c0_13, %c0_14] : memref<1x128xf32, #tpu.memory_space<vmem>>, vector<1x128xf32>
    %20 = vector.broadcast %19 : vector<1x128xf32> to vector<8x128xf32>
    %21 = arith.addf %18, %20 : vector<8x128xf32>
    %cst_15 = arith.constant dense<0xFF800000> : vector<8xf32>
    %22 = vector.multi_reduction <maximumf>, %21, %cst_15 [1] : vector<8x128xf32> to vector<8xf32>
    %23 = vector.shape_cast %22 : vector<8xf32> to vector<8x1xf32>
    %24 = vector.broadcast %23 : vector<8x1xf32> to vector<8x128xf32>
    %25 = arith.subf %21, %24 : vector<8x128xf32>
    %26 = math.exp %25 : vector<8x128xf32>
    %cst_16 = arith.constant dense<0.000000e+00> : vector<8xf32>
    %27 = vector.multi_reduction <add>, %26, %cst_16 [1] : vector<8x128xf32> to vector<8xf32>
    %28 = vector.shape_cast %27 : vector<8xf32> to vector<8x1xf32>
    %29 = math.log %28 : vector<8x1xf32>
    %30 = vector.broadcast %29 : vector<8x1xf32> to vector<8x128xf32>
    %31 = arith.subf %25, %30 : vector<8x128xf32>
    %c0_17 = arith.constant 0 : index
    %c0_18 = arith.constant 0 : index
    %32 = vector.load %arg7[%c0_17, %c0_18] : memref<8x128xf32, #tpu.memory_space<vmem>>, vector<8x128xf32>
    tpu.vector_store %arg7[%c0_17, %c0_18], %31 {strides = array<i32>} : memref<8x128xf32, #tpu.memory_space<vmem>>, vector<8x128xf32>,
    return
  }
  func.func @transform_0(%arg0: i32) -> (i32, i32) {
    %c0_i32 = arith.constant 0 : i32
    %c0_i32_0 = arith.constant 0 : i32
    return %arg0, %c0_i32 : i32, i32
  }
  func.func @transform_1(%arg0: i32) -> (i32, i32) {
    %c0_i32 = arith.constant 0 : i32
    %c0_i32_0 = arith.constant 0 : i32
    %c0_i32_1 = arith.constant 0 : i32
    return %c0_i32, %c0_i32_0 : i32, i32
  }
  func.func @transform_2(%arg0: i32) -> (i32, i32) {
    %c0_i32 = arith.constant 0 : i32
    %c0_i32_0 = arith.constant 0 : i32
    %c0_i32_1 = arith.constant 0 : i32
    return %c0_i32, %c0_i32_0 : i32, i32
  }
  func.func @transform_3(%arg0: i32) -> (i32, i32) {
    %c0_i32 = arith.constant 0 : i32
    %c0_i32_0 = arith.constant 0 : i32
    %c0_i32_1 = arith.constant 0 : i32
    return %c0_i32, %c0_i32_0 : i32, i32
  }
  func.func @transform_4(%arg0: i32) -> (i32, i32) {
    %c0_i32 = arith.constant 0 : i32
    %c0_i32_0 = arith.constant 0 : i32
    %c0_i32_1 = arith.constant 0 : i32
    return %c0_i32, %c0_i32_0 : i32, i32
  }
  func.func @transform_5(%arg0: i32) -> (i32, i32) {
    %c0_i32 = arith.constant 0 : i32
    %c0_i32_0 = arith.constant 0 : i32
    %c0_i32_1 = arith.constant 0 : i32
    return %c0_i32, %c0_i32_0 : i32, i32
  }
  func.func @transform_6(%arg0: i32) -> (i32, i32) {
    %c0_i32 = arith.constant 0 : i32
    %c0_i32_0 = arith.constant 0 : i32
    return %arg0, %c0_i32 : i32, i32
  }
}

</mosaic_0001>

<llo_original>
// kernel: tpu_custom_call.1
$region0: #{tpu_custom_call.1}
  #allocation0 [shape = 'u32[]', space=smem, size = 0x4, offset = 0x4, fixed_abs, tag = 'smem constant byte address 0x4 - core index']
  #allocation1 [shape = 'u32[72,128]{1,0:T(1,128)}', space=vmem, size = 0x9000, scoped, tag = 'internal scratch']
  %s0 = inlined_call_operand.vmem [shape: s32[16,1], index: 0, kind: input, shape index: {}]
  %s1 = inlined_call_operand.vmem [shape: f32[16,128], index: 1, kind: input, shape index: {}]
  %s2 = inlined_call_operand.hbm [shape: f32[128,128], index: 2, kind: input, shape index: {}]
  %s3 = inlined_call_operand.vmem [shape: f32[1,128], index: 3, kind: input, shape index: {}]
  %s4 = inlined_call_operand.hbm [shape: f32[128,128], index: 4, kind: input, shape index: {}]
  %s5 = inlined_call_operand.vmem [shape: f32[1,128], index: 5, kind: input, shape index: {}]
  %s6 = inlined_call_operand.hbm [shape: f32[16,128], index: 6, kind: output, shape index: {}]
  %s7 = sld [smem:[#allocation0]]
  $region65: #{tpu_custom_call.1} parent=0
    _
  %s9 = ssub.s32 1, %s7
  %s10 = scalar_select 0, %s9, %s7
  $region1: #{tpu_custom_call.1} parent=0
    #allocation2 [shape = 'u8[65536]{0}', space=vmem, size = 0x10000, scoped, tag = 'input window, operand 2, single buffered']
    #allocation3 [shape = 's32[2]{0}', space=sflag, size = 0x8, scoped, tag = 'scoped memory for tpu_custom_call.1']
    #allocation4 [shape = 's32[2]{0}', space=sflag, size = 0x8, scoped, tag = 'scoped memory for tpu_custom_call.1']
    #allocation5 [shape = 'u8[65536]{0}', space=vmem, size = 0x10000, scoped, tag = 'input window, operand 4, single buffered']
    #allocation6 [shape = 's32[1]{0}', space=sflag, size = 0x4, scoped, tag = 'scoped memory for tpu_custom_call.1']
    #allocation7 [shape = 'u8[8192]{0}', space=vmem, size = 0x2000, scoped, tag = 'output window, operand 0']
    %11 = vsyncpa [#allocation3], 0
    %12 = vsyncpa [#allocation6], 0
    %13 = vsyncpa [#allocation4], 0
    %s14 = scalar_lea.sflag [#allocation4], 1
    %15 = vsyncpa %s14, 0
    loop: start=0, step=1, limit=4
    $region2: #{tpu_custom_call.1} parent=1 // loop_pre_header
      _
    $region3: #{tpu_custom_call.1} parent=1 // loop_header
      %s17 = sphi 0, %s21
      %p18 = scmp.ge.s32.totalorder %s17, 4
      %s27 = sphi 0, %s29
      %s30 = sphi 0, %s27
      %s31 = sphi 0, %s30
      %s47 = sphi 0, %s31
      %s51 = sphi 0, %s51
      %s53 = sphi 0, %s51
      %s54 = sphi 0, %s53
      %s68 = sphi 0, %s54
      %s72 = sphi 0, %s72
      %s74 = sphi 0, %s72
      %s75 = sphi 0, %s74
      %s89 = sphi 0, %s75
      %s93 = sphi 0, %s93
      %s95 = sphi 0, %s93
      %s96 = sphi 0, %s95
      %s110 = sphi 0, %s96
      %s114 = sphi 0, %s114
      %s116 = sphi 0, %s114
      %s117 = sphi 0, %s116
      %s131 = sphi 0, %s117
      %s135 = sphi 0, %s135
      %s137 = sphi 0, %s135
      %s138 = sphi 0, %s137
      %s152 = sphi 0, %s138
      %s158 = sphi 0, %s160
      %s161 = sphi 0, %s158
      %s162 = sphi 0, %s161
      %s178 = sphi 0, %s162
    $region4: #{tpu_custom_call.1} parent=1 // loop_header_branch
      %20 = sbr.rel (%p18) target = $region8
    $region5: #{tpu_custom_call.1} parent=1 // loop_body
      %s22 = ssub.s32 %s17, 1
      %s23 = ssub.s32 %s17, 2
      %s24 = sadd.s32 %s17, 1
      %s25 = ssub.s32 %s17, %s24
      %p26 = scmp.eq.s32.totalorder %s25, 0
      %s28 = sadd.s32 %s27, 1
      %s29 = scalar_select %p26, %s27, %s28
      %p32 = pneg %p26
      %p33 = scmp.eq.s32.totalorder %s17, 1
      %p34 = por %p32, %p33
      %p35 = scmp.ne.s32.totalorder %s27, %s30
      %p36 = scmp.eq.s32.totalorder %s17, 0
      %p37 = por %p35, %p36
      %p38 = scmp.ne.s32.totalorder %s27, %s30
      %p39 = scmp.eq.s32.totalorder %s22, 1
      %p40 = por %p38, %p39
      %p41 = scmp.ne.s32.totalorder %s30, %s31
      %p42 = scmp.eq.s32.totalorder %s22, 0
      %p43 = por %p41, %p42
      %p44 = scmp.ne.s32.totalorder %s30, %s31
      %p45 = scmp.eq.s32.totalorder %s23, 1
      %p46 = por %p44, %p45
      %p48 = scmp.ne.s32.totalorder %s31, %s47
      %p49 = scmp.eq.s32.totalorder %s23, 0
      %p50 = por %p48, %p49
      %s52 = sadd.s32 %s51, 1
      %p55 = scmp.eq.s32.totalorder %s17, 1
      %p56 = scmp.ne.s32.totalorder %s51, %s53
      %p57 = scmp.eq.s32.totalorder %s17, 0
      %p58 = por %p56, %p57
      %p59 = scmp.ne.s32.totalorder %s51, %s53
      %p60 = scmp.eq.s32.totalorder %s22, 1
      %p61 = por %p59, %p60
      %p62 = scmp.ne.s32.totalorder %s53, %s54
      %p63 = scmp.eq.s32.totalorder %s22, 0
      %p64 = por %p62, %p63
      %p65 = scmp.ne.s32.totalorder %s53, %s54
      %p66 = scmp.eq.s32.totalorder %s23, 1
      %p67 = por %p65, %p66
      %p69 = scmp.ne.s32.totalorder %s54, %s68
      %p70 = scmp.eq.s32.totalorder %s23, 0
      %p71 = por %p69, %p70
      %s73 = sadd.s32 %s72, 1
      %p76 = scmp.eq.s32.totalorder %s17, 1
      %p77 = scmp.ne.s32.totalorder %s72, %s74
      %p78 = scmp.eq.s32.totalorder %s17, 0
      %p79 = por %p77, %p78
      %p80 = scmp.ne.s32.totalorder %s72, %s74
      %p81 = scmp.eq.s32.totalorder %s22, 1
      %p82 = por %p80, %p81
      %p83 = scmp.ne.s32.totalorder %s74, %s75
      %p84 = scmp.eq.s32.totalorder %s22, 0
      %p85 = por %p83, %p84
      %p86 = scmp.ne.s32.totalorder %s74, %s75
      %p87 = scmp.eq.s32.totalorder %s23, 1
      %p88 = por %p86, %p87
      %p90 = scmp.ne.s32.totalorder %s75, %s89
      %p91 = scmp.eq.s32.totalorder %s23, 0
      %p92 = por %p90, %p91
      %s94 = sadd.s32 %s93, 1
      %p97 = scmp.eq.s32.totalorder %s17, 1
      %p98 = scmp.ne.s32.totalorder %s93, %s95
      %p99 = scmp.eq.s32.totalorder %s17, 0
      %p100 = por %p98, %p99
      %p101 = scmp.ne.s32.totalorder %s93, %s95
      %p102 = scmp.eq.s32.totalorder %s22, 1
      %p103 = por %p101, %p102
      %p104 = scmp.ne.s32.totalorder %s95, %s96
      %p105 = scmp.eq.s32.totalorder %s22, 0
      %p106 = por %p104, %p105
      %p107 = scmp.ne.s32.totalorder %s95, %s96
      %p108 = scmp.eq.s32.totalorder %s23, 1
      %p109 = por %p107, %p108
      %p111 = scmp.ne.s32.totalorder %s96, %s110
      %p112 = scmp.eq.s32.totalorder %s23, 0
      %p113 = por %p111, %p112
      %s115 = sadd.s32 %s114, 1
      %p118 = scmp.eq.s32.totalorder %s17, 1
      %p119 = scmp.ne.s32.totalorder %s114, %s116
      %p120 = scmp.eq.s32.totalorder %s17, 0
      %p121 = por %p119, %p120
      %p122 = scmp.ne.s32.totalorder %s114, %s116
      %p123 = scmp.eq.s32.totalorder %s22, 1
      %p124 = por %p122, %p123
      %p125 = scmp.ne.s32.totalorder %s116, %s117
      %p126 = scmp.eq.s32.totalorder %s22, 0
      %p127 = por %p125, %p126
      %p128 = scmp.ne.s32.totalorder %s116, %s117
      %p129 = scmp.eq.s32.totalorder %s23, 1
      %p130 = por %p128, %p129
      %p132 = scmp.ne.s32.totalorder %s117, %s131
      %p133 = scmp.eq.s32.totalorder %s23, 0
      %p134 = por %p132, %p133
      %s136 = sadd.s32 %s135, 1
      %p139 = scmp.eq.s32.totalorder %s17, 1
      %p140 = scmp.ne.s32.totalorder %s135, %s137
      %p141 = scmp.eq.s32.totalorder %s17, 0
      %p142 = por %p140, %p141
      %p143 = scmp.ne.s32.totalorder %s135, %s137
      %p144 = scmp.eq.s32.totalorder %s22, 1
      %p145 = por %p143, %p144
      %p146 = scmp.ne.s32.totalorder %s137, %s138
      %p147 = scmp.eq.s32.totalorder %s22, 0
      %p148 = por %p146, %p147
      %p149 = scmp.ne.s32.totalorder %s137, %s138
      %p150 = scmp.eq.s32.totalorder %s23, 1
      %p151 = por %p149, %p150
      %p153 = scmp.ne.s32.totalorder %s138, %s152
      %p154 = scmp.eq.s32.totalorder %s23, 0
      %p155 = por %p153, %p154
      %s156 = ssub.s32 %s17, %s24
      %p157 = scmp.eq.s32.totalorder %s156, 0
      %s159 = sadd.s32 %s158, 1
      %s160 = scalar_select %p157, %s158, %s159
      %p163 = pneg %p157
      %p164 = scmp.eq.s32.totalorder %s17, 1
      %p165 = por %p163, %p164
      %p166 = scmp.ne.s32.totalorder %s158, %s161
      %p167 = scmp.eq.s32.totalorder %s17, 0
      %p168 = por %p166, %p167
      %p169 = scmp.ne.s32.totalorder %s158, %s161
      %p170 = scmp.eq.s32.totalorder %s22, 1
      %p171 = por %p169, %p170
      %p172 = scmp.ne.s32.totalorder %s161, %s162
      %p173 = scmp.eq.s32.totalorder %s22, 0
      %p174 = por %p172, %p173
      %p175 = scmp.ne.s32.totalorder %s161, %s162
      %p176 = scmp.eq.s32.totalorder %s23, 1
      %p177 = por %p175, %p176
      %p179 = scmp.ne.s32.totalorder %s162, %s178
      %p180 = scmp.eq.s32.totalorder %s23, 0
      %p181 = por %p179, %p180
      %p182 = scmp.le.s32.totalorder 1, %s17
      %p183 = scmp.lt.s32.totalorder %s17, 3
      %p184 = pnand %p182, %p183
      %p185 = pneg %p184
      // Predicated region
      $region9: #{tpu_custom_call.1} parent=5 // pred_check
        _
      $region10: #{tpu_custom_call.1} parent=5 // pred_check_branch
        %187 = sbr.rel (%p184) target = $region12
      $region11: #{tpu_custom_call.1} parent=5 // pred_region
        %s188 = ssub.s32 %s17, 1
        // Predicated region
        $region13: #{tpu_custom_call.1} parent=11 // pred_check
          %p189 = pneg %p64
        $region14: #{tpu_custom_call.1} parent=11 // pred_check_branch
          %191 = sbr.rel (%p189) target = $region16
        $region15: #{tpu_custom_call.1} parent=11 // pred_region
          _
        $region16: #{tpu_custom_call.1} parent=11 // pred_fallthru
          _
        // Predicated region
        $region17: #{tpu_custom_call.1} parent=11 // pred_check
          %p192 = pneg %p85
        $region18: #{tpu_custom_call.1} parent=11 // pred_check_branch
          %194 = sbr.rel (%p192) target = $region20
        $region19: #{tpu_custom_call.1} parent=11 // pred_region
          %196 = vsyncadd [#allocation3], 0
          %s197 = sshll.u32 %s2, 4
          %s198 = int_to_ptr.hbm [resolvable:$true] %s197
          %s199 = sshll.u32 [#allocation2], 4
          %s200 = int_to_ptr.vmem [resolvable:$true] %s199
          %205 = dma.hbm_to_vmem [thread:$0]  %s198, 2048, %s200, [#allocation3], 128, 128, 8
        $region20: #{tpu_custom_call.1} parent=11 // pred_fallthru
          _
        // Predicated region
        $region21: #{tpu_custom_call.1} parent=11 // pred_check
          %p206 = pneg %p106
        $region22: #{tpu_custom_call.1} parent=11 // pred_check_branch
          %208 = sbr.rel (%p206) target = $region24
        $region23: #{tpu_custom_call.1} parent=11 // pred_region
          _
        $region24: #{tpu_custom_call.1} parent=11 // pred_fallthru
          _
        // Predicated region
        $region25: #{tpu_custom_call.1} parent=11 // pred_check
          %p209 = pneg %p127
        $region26: #{tpu_custom_call.1} parent=11 // pred_check_branch
          %211 = sbr.rel (%p209) target = $region28
        $region27: #{tpu_custom_call.1} parent=11 // pred_region
          %213 = vsyncadd [#allocation6], 0
          %s214 = sshll.u32 %s4, 4
          %s215 = int_to_ptr.hbm [resolvable:$true] %s214
          %s216 = sshll.u32 [#allocation5], 4
          %s217 = int_to_ptr.vmem [resolvable:$true] %s216
          %222 = dma.hbm_to_vmem [thread:$0]  %s215, 2048, %s217, [#allocation6], 128, 128, 8
        $region28: #{tpu_custom_call.1} parent=11 // pred_fallthru
          _
        // Predicated region
        $region29: #{tpu_custom_call.1} parent=11 // pred_check
          %p223 = pneg %p148
        $region30: #{tpu_custom_call.1} parent=11 // pred_check_branch
          %225 = sbr.rel (%p223) target = $region32
        $region31: #{tpu_custom_call.1} parent=11 // pred_region
          _
        $region32: #{tpu_custom_call.1} parent=11 // pred_fallthru
          _
      $region12: #{tpu_custom_call.1} parent=5 // pred_fallthru
        _
      %p226 = scmp.lt.s32.totalorder %s17, 2
      // Predicated region
      $region33: #{tpu_custom_call.1} parent=5 // pred_check
        %p227 = pneg %p226
      $region34: #{tpu_custom_call.1} parent=5 // pred_check_branch
        %229 = sbr.rel (%p227) target = $region36
      $region35: #{tpu_custom_call.1} parent=5 // pred_region
        // Predicated region
        $region37: #{tpu_custom_call.1} parent=35 // pred_check
          %p230 = pneg %p37
        $region38: #{tpu_custom_call.1} parent=35 // pred_check_branch
          %232 = sbr.rel (%p230) target = $region40
        $region39: #{tpu_custom_call.1} parent=35 // pred_region
          %p233 = scmp.lt.s32.totalorder %s17, 1
          %s234 = scalar_select %p233, %s17, 1
          %s235 = smul.addr %s234, 8
          %s236 = scalar_lea.vmem %s0, %s235
        $region40: #{tpu_custom_call.1} parent=35 // pred_fallthru
          _
      $region36: #{tpu_custom_call.1} parent=5 // pred_fallthru
        _
      %p237 = scmp.le.s32.totalorder 1, %s17
      %p238 = scmp.lt.s32.totalorder %s17, 3
      %p239 = pnand %p237, %p238
      %p240 = pneg %p239
      // Predicated region
      $region41: #{tpu_custom_call.1} parent=5 // pred_check
        _
      $region42: #{tpu_custom_call.1} parent=5 // pred_check_branch
        %242 = sbr.rel (%p239) target = $region44
      $region43: #{tpu_custom_call.1} parent=5 // pred_region
        %s243 = ssub.s32 %s17, 1
        // Predicated region
        $region45: #{tpu_custom_call.1} parent=43 // pred_check
          %p244 = pneg %p85
        $region46: #{tpu_custom_call.1} parent=43 // pred_check_branch
          %246 = sbr.rel (%p244) target = $region48
        $region47: #{tpu_custom_call.1} parent=43 // pred_region
          %248 = dma.done [#allocation3], 2048
        $region48: #{tpu_custom_call.1} parent=43 // pred_fallthru
          _
        // Predicated region
        $region49: #{tpu_custom_call.1} parent=43 // pred_check
          %p249 = pneg %p127
        $region50: #{tpu_custom_call.1} parent=43 // pred_check_branch
          %251 = sbr.rel (%p249) target = $region52
        $region51: #{tpu_custom_call.1} parent=43 // pred_region
          %253 = dma.done [#allocation6], 2048
        $region52: #{tpu_custom_call.1} parent=43 // pred_fallthru
          _
        %p254 = scmp.lt.s32.totalorder %s22, 1
        %s255 = scalar_select %p254, %s22, 1
        %s256 = smul.addr %s255, 8
        %s257 = scalar_lea.vmem %s0, %s256
        %p258 = pneg %p43
        %p259 = pneg %p40
        %p260 = pneg %p64
        %p261 = pneg %p61
        %p262 = pneg %p85
        %p263 = pneg %p82
        %p264 = pneg %p106
        %p265 = pneg %p103
        %p266 = pneg %p127
        %p267 = pneg %p124
        %p268 = pneg %p148
        %p269 = pneg %p145
        %p270 = pneg %p174
        %p271 = pneg %p171
        %s272 = sand.u32 %s161, 1
        %s273 = scalar_lea.sflag [#allocation4], %s272
        %s274 = sand.u32 %s161, 1
        %s275 = smul.addr %s274, 8
        %s276 = scalar_lea.vmem [#allocation7], %s275
        %p277 = scmp.lt.s32.totalorder %s22, 1
        %s278 = scalar_select %p277, %s22, 1
        %s279 = smul.addr %s278, 8
        %s280 = scalar_lea.vmem %s0, %s279
        %v281 = vld [vmem:[%s280] sm:$0xff]
        %v282 = vlaneseq
        %v283 = vand.u32 %v282, 127
        %284 = vset.pattern.permute.xlu0 0
        %285 = vperm.xlu0 %284, %v281
        %v286 = vpop.permute.xlu0 %285
        %vm287 = vcmp.eq.s32.totalorder %v283, %v286
        %v288 = vsel %vm287, 1, 0
        %v289 = vcvt.s32.f32 %v288
        %v290 = vld [vmem:[%s1] sm:$0xff]
        %v291 = vld [vmem:[%s1 + $0x8] sm:$0xff]
        %vm292 = vcmask 130048
        %v294 = vsel %vm292, %v289, 0
        %296 = vmatpush.msra.mxu0 0.0
        %297 = vmatpush.msra.mxu0 0.0
        %298 = vmatpush.msra.mxu0 0.0
        %299 = vmatpush.msra.mxu0 0.0
        %300 = vmatpush.msra.mxu0 0.0
        %301 = vmatpush.msra.mxu0 0.0
        %302 = vmatpush.msra.mxu0 0.0
        %303 = vmatpush.msra.mxu0 0.0
        %304 = vmatpush.msra.mxu0 0.0
        %305 = vmatpush.msra.mxu0 0.0
        %306 = vmatpush.msra.mxu0 0.0
        %307 = vmatpush.msra.mxu0 0.0
        %308 = vmatpush.msra.mxu0 0.0
        %309 = vmatpush.msra.mxu0 0.0
        %310 = vmatpush.msra.mxu0 %v291
        %311 = vmatpush.msra.mxu0 %v290
        %312 = vmatmul.f32.gmra.mxu0 %v294
        %v313 = vpop.f32.mrf.mxu0
        %v314 = vadd.f32 0.0, %v313
        %315 = vdwg.mxu0
        %v316 = vmax.f32 %v314, 0.0
        %v317 = vld [vmem:[#allocation2] sm:$0xff]
        %v318 = vld [vmem:[#allocation2 + $0x8] sm:$0xff]
        %v319 = vld [vmem:[#allocation2 + $0x10] sm:$0xff]
        %v320 = vld [vmem:[#allocation2 + $0x18] sm:$0xff]
        %v321 = vld [vmem:[#allocation2 + $0x20] sm:$0xff]
        %v322 = vld [vmem:[#allocation2 + $0x28] sm:$0xff]
        %v323 = vld [vmem:[#allocation2 + $0x30] sm:$0xff]
        %v324 = vld [vmem:[#allocation2 + $0x38] sm:$0xff]
        %v325 = vld [vmem:[#allocation2 + $0x40] sm:$0xff]
        %v326 = vld [vmem:[#allocation2 + $0x48] sm:$0xff]
        %v327 = vld [vmem:[#allocation2 + $0x50] sm:$0xff]
        %v328 = vld [vmem:[#allocation2 + $0x58] sm:$0xff]
        %v329 = vld [vmem:[#allocation2 + $0x60] sm:$0xff]
        %v330 = vld [vmem:[#allocation2 + $0x68] sm:$0xff]
        %v331 = vld [vmem:[#allocation2 + $0x70] sm:$0xff]
        %v332 = vld [vmem:[#allocation2 + $0x78] sm:$0xff]
        %v333 = vld [vmem:[%s3] sm:$0x1]
        %v335 = vperm.slane %v333, 0
        %337 = vmatpush.msra.mxu0 %v332
        %338 = vmatpush.msra.mxu0 %v331
        %339 = vmatpush.msra.mxu0 %v330
        %340 = vmatpush.msra.mxu0 %v329
        %341 = vmatpush.msra.mxu0 %v328
        %342 = vmatpush.msra.mxu0 %v327
        %343 = vmatpush.msra.mxu0 %v326
        %344 = vmatpush.msra.mxu0 %v325
        %345 = vmatpush.msra.mxu0 %v324
        %346 = vmatpush.msra.mxu0 %v323
        %347 = vmatpush.msra.mxu0 %v322
        %348 = vmatpush.msra.mxu0 %v321
        %349 = vmatpush.msra.mxu0 %v320
        %350 = vmatpush.msra.mxu0 %v319
        %351 = vmatpush.msra.mxu0 %v318
        %352 = vmatpush.msra.mxu0 %v317
        %353 = vmatmul.f32.gmra.mxu0 %v316
        %v354 = vpop.f32.mrf.mxu0
        %v355 = vadd.f32 %v335, %v354
        %356 = vdwg.mxu0
        %v357 = vmax.f32 %v355, 0.0
        %v358 = vld [vmem:[#allocation5] sm:$0xff]
        %v359 = vld [vmem:[#allocation5 + $0x8] sm:$0xff]
        %v360 = vld [vmem:[#allocation5 + $0x10] sm:$0xff]
        %v361 = vld [vmem:[#allocation5 + $0x18] sm:$0xff]
        %v362 = vld [vmem:[#allocation5 + $0x20] sm:$0xff]
        %v363 = vld [vmem:[#allocation5 + $0x28] sm:$0xff]
        %v364 = vld [vmem:[#allocation5 + $0x30] sm:$0xff]
        %v365 = vld [vmem:[#allocation5 + $0x38] sm:$0xff]
        %v366 = vld [vmem:[#allocation5 + $0x40] sm:$0xff]
        %v367 = vld [vmem:[#allocation5 + $0x48] sm:$0xff]
        %v368 = vld [vmem:[#allocation5 + $0x50] sm:$0xff]
        %v369 = vld [vmem:[#allocation5 + $0x58] sm:$0xff]
        %v370 = vld [vmem:[#allocation5 + $0x60] sm:$0xff]
        %v371 = vld [vmem:[#allocation5 + $0x68] sm:$0xff]
        %v372 = vld [vmem:[#allocation5 + $0x70] sm:$0xff]
        %v373 = vld [vmem:[#allocation5 + $0x78] sm:$0xff]
        %v374 = vld [vmem:[%s5] sm:$0x1]
        %v376 = vperm.slane %v374, 0
        %378 = vmatpush.msra.mxu0 %v373
        %379 = vmatpush.msra.mxu0 %v372
        %380 = vmatpush.msra.mxu0 %v371
        %381 = vmatpush.msra.mxu0 %v370
        %382 = vmatpush.msra.mxu0 %v369
        %383 = vmatpush.msra.mxu0 %v368
        %384 = vmatpush.msra.mxu0 %v367
        %385 = vmatpush.msra.mxu0 %v366
        %386 = vmatpush.msra.mxu0 %v365
        %387 = vmatpush.msra.mxu0 %v364
        %388 = vmatpush.msra.mxu0 %v363
        %389 = vmatpush.msra.mxu0 %v362
        %390 = vmatpush.msra.mxu0 %v361
        %391 = vmatpush.msra.mxu0 %v360
        %392 = vmatpush.msra.mxu0 %v359
        %393 = vmatpush.msra.mxu0 %v358
        %394 = vmatmul.f32.gmra.mxu0 %v357
        %v395 = vpop.f32.mrf.mxu0
        %v396 = vadd.f32 %v376, %v395
        %397 = vdwg.mxu0
        %398 = vmax.xlane.f32.xlu0 %v396
        %v399 = vpop.xlane.xlu0 %398
        %v400 = vsub.f32 %v396, %v399
        %v401 = vmul.f32 %v400, 1.442695
        %v402 = vpow.pop %v401
        %403 = vadd.xlane.f32.xlu0 %v402
        %v404 = vpop.xlane.xlu0 %403
        %v405 = vlog2.pop %v404
        %v406 = vmul.f32 %v405, 0.6931472
        %v407 = vsub.f32 %v400, %v406
        %408 = vst [vmem:[%s276] sm:$0xff] %v407
        %s409 = sand.u32 %s161, 1
        %s410 = scalar_lea.sflag [#allocation4], %s409
        %s411 = sand.u32 %s161, 1
        %s412 = smul.addr %s411, 8
        %s413 = scalar_lea.vmem [#allocation7], %s412
        // Predicated region
        $region53: #{tpu_custom_call.1} parent=43 // pred_check
          %p414 = pneg %p171
        $region54: #{tpu_custom_call.1} parent=43 // pred_check_branch
          %416 = sbr.rel (%p414) target = $region56
        $region55: #{tpu_custom_call.1} parent=43 // pred_region
          %418 = vsyncadd %s410, 0
          %s419 = smul.addr %s22, 8
          %s420 = scalar_lea.hbm %s6, %s419
          %s422 = sshll.u32 %s413, 4
          %s423 = int_to_ptr.vmem [resolvable:$true] %s422
          %s424 = sshll.u32 %s420, 4
          %s425 = int_to_ptr.hbm [resolvable:$true] %s424
          %427 = dma.vmem_to_hbm [thread:$0]  %s423, 128, %s425, %s410
        $region56: #{tpu_custom_call.1} parent=43 // pred_fallthru
          _
      $region44: #{tpu_custom_call.1} parent=5 // pred_fallthru
        _
      %p428 = scmp.le.s32.totalorder 2, %s17
      // Predicated region
      $region57: #{tpu_custom_call.1} parent=5 // pred_check
        %p429 = pneg %p428
      $region58: #{tpu_custom_call.1} parent=5 // pred_check_branch
        %431 = sbr.rel (%p429) target = $region60
      $region59: #{tpu_custom_call.1} parent=5 // pred_region
        %s432 = ssub.s32 %s17, 2
        // Predicated region
        $region61: #{tpu_custom_call.1} parent=59 // pred_check
          %p433 = pneg %p177
        $region62: #{tpu_custom_call.1} parent=59 // pred_check_branch
          %435 = sbr.rel (%p433) target = $region64
        $region63: #{tpu_custom_call.1} parent=59 // pred_region
          %s436 = sand.u32 %s162, 1
          %s437 = scalar_lea.sflag [#allocation4], %s436
          %s438 = sand.u32 %s162, 1
          %s439 = smul.addr %s438, 8
          %s440 = scalar_lea.vmem [#allocation7], %s439
          %442 = dma.done %s437, 128
        $region64: #{tpu_custom_call.1} parent=59 // pred_fallthru
          _
      $region60: #{tpu_custom_call.1} parent=5 // pred_fallthru
        _
    $region6: #{tpu_custom_call.1} parent=1 // loop_footer
      %s21 = sadd.s32 1, %s17
    $region7: #{tpu_custom_call.1} parent=1 // loop_footer_branch
      %16 = sbr.rel target = $region3
    $region8: #{tpu_custom_call.1} parent=1 // loop_exit
      _
    %443 = vsyncpa [#allocation3], 1
    %s444 = scalar_lea.sflag [#allocation3], 1
    %445 = vsyncpa %s444, 1
    %446 = vsyncpa [#allocation6], 1
    %447 = vsyncpa [#allocation4], 1
    %s448 = scalar_lea.sflag [#allocation4], 1
    %449 = vsyncpa %s448, 1

</llo_original>
